<compile_context>
chip_gen: v6e
topology: v6e:2x2x1
jax: 0.10.0
libtpu: 0.0.40
codegen_flags: <defaults>
</compile_context>

<pallas_src>
import jax
import jax.numpy as jnp
from jax.experimental import pallas as pl
from jax.experimental.pallas import tpu as pltpu


# --------------------------------------------------------------------------- #
# Kernels
# --------------------------------------------------------------------------- #
def _acc_dtype(out_dtype):
    return jnp.float32 if jnp.issubdtype(out_dtype, jnp.floating) else jnp.int32


def _rs_per_rank_kernel(x_ref, o_ref):
    # x_ref: (W, tm, C)  -- all W peers' r-th chunk of this M tile
    # o_ref: (tm, C)     -- rank r's output tile
    W = x_ref.shape[0]
    acc_t = _acc_dtype(o_ref.dtype)
    acc = x_ref[0].astype(acc_t)
    for p in range(1, W):            # static unrolled loop, one (tm, C) acc live
        acc = acc + x_ref[p].astype(acc_t)
    o_ref[...] = acc.astype(o_ref.dtype)


def _rs_full_row_kernel(x_ref, o_ref):
    # x_ref: (W, tm, D)  -- contiguous full rows of this M tile from all peers
    # o_ref: (W, tm, C)  -- every rank's chunk-sum for this M tile
    W, _, D = x_ref.shape
    C = D // W
    acc_t = _acc_dtype(o_ref.dtype)
    for r in range(W):               # static unroll over output ranks
        acc = x_ref[0, :, r * C:(r + 1) * C].astype(acc_t)
        for p in range(1, W):
            acc = acc + x_ref[p, :, r * C:(r + 1) * C].astype(acc_t)
        o_ref[r] = acc.astype(o_ref.dtype)


# --------------------------------------------------------------------------- #
# Wrapper
# --------------------------------------------------------------------------- #
def _vmem_physical_bytes():
    try:
        return int(pltpu.get_tpu_info().vmem_capacity_bytes)
    except Exception:
        return 64 << 20  # conservative (v7x per-TC)


def reduce_scatter_sum_lastdim(x_stacked, *, target_in_bytes=8 << 20):
    """x_stacked: [W, M, D] -> [W, M, D // W] with out[r] = sum_p x[p, :, r*C:(r+1)*C]."""
    W, M, D = x_stacked.shape
    assert D % W == 0, "scatter dim must be divisible by world size"
    C = D // W
    dtype = x_stacked.dtype
    itemsize = jnp.dtype(dtype).itemsize

    # Sublane packing granularity: f32 -> 8, bf16 -> 16, int8/fp8 -> 32.
    granularity = max(8, 32 // itemsize)

    phys_vmem = _vmem_physical_bytes()
    # Scoped ceiling: <= half of physical VMEM, never above 64 MiB
    # (=> ~32 MiB on v7x's 64 MiB parts, ~64 MiB on v5e/v6e's 128 MiB parts).
    vmem_ceiling = min(phys_vmem // 2, 64 << 20)
    headroom = 2 << 20

    # Layout choice: strided per-rank blocks are only worthwhile when each
    # contiguous HBM run (C * itemsize) is reasonably long and C is lane-dense.
    use_full_row = (C % 128 != 0) or (C * itemsize < 512)

    if use_full_row:
        in_row_bytes = W * D * itemsize        # (W, tm, D) input block per row
        out_row_bytes = W * C * itemsize       # (W, tm, C) output block per row
    else:
        in_row_bytes = W * C * itemsize        # (W, tm, C) input block per row
        out_row_bytes = C * itemsize           # (tm, C)    output block per row

    # tm from byte budget (amortize ~0.35 us/step) and the VMEM ceiling
    # (double-buffered input + output blocks).
    tm_budget = max(1, target_in_bytes // in_row_bytes)
    tm_vmem = max(1, (vmem_ceiling - headroom) // (2 * (in_row_bytes + out_row_bytes)))
    tm = min(tm_budget, tm_vmem, M)
    tm = max(granularity, (tm // granularity) * granularity)
    tm = min(tm, ((M + granularity - 1) // granularity) * granularity)

    num_m_tiles = pl.cdiv(M, tm)

    # Deeper input pipelining only where VMEM is plentiful (v5e/v6e, 128 MiB)
    # and there are enough grid steps for it to matter.
    in_buf_count = 2
    if phys_vmem >= (128 << 20) and num_m_tiles >= 3:
        if (3 * in_row_bytes + 2 * out_row_bytes) * tm + headroom <= vmem_ceiling:
            in_buf_count = 3

    tile_bytes = (in_buf_count * in_row_bytes + 2 * out_row_bytes) * tm
    vmem_limit = int(min(vmem_ceiling, max(8 << 20, tile_bytes + headroom)))

    cost = pl.CostEstimate(
        flops=(W - 1) * W * M * C,                       # (W-1) adds per output element
        transcendentals=0,
        bytes_accessed=(W * M * D + W * M * C) * itemsize,
    )
    out_shape = jax.ShapeDtypeStruct((W, M, C), dtype)

    if use_full_row:
        # Contiguous full-row reads (long HBM bursts); all W chunk sums per step.
        in_spec_kwargs = {}
        if in_buf_count != 2:
            in_spec_kwargs["pipeline_mode"] = pl.Buffered(in_buf_count)
        return pl.pallas_call(
            _rs_full_row_kernel,
            out_shape=out_shape,
            grid_spec=pltpu.PrefetchScalarGridSpec(
                num_scalar_prefetch=0,
                grid=(num_m_tiles,),
                in_specs=[pl.BlockSpec((W, tm, D), lambda i: (0, i, 0),
                                       **in_spec_kwargs)],
                out_specs=pl.BlockSpec((W, tm, C), lambda i: (0, i, 0)),
            ),
            compiler_params=pltpu.CompilerParams(
                dimension_semantics=("parallel",),
                vmem_limit_bytes=vmem_limit,
            ),
            cost_estimate=cost,
        )(x_stacked)

    # Strided per-rank layout: grid (M-tile, rank), both independent -> parallel.
    in_spec_kwargs = {}
    if in_buf_count != 2:
        in_spec_kwargs["pipeline_mode"] = pl.Buffered(in_buf_count)
    return pl.pallas_call(
        _rs_per_rank_kernel,
        out_shape=out_shape,
        grid_spec=pltpu.PrefetchScalarGridSpec(
            num_scalar_prefetch=0,
            grid=(num_m_tiles, W),
            in_specs=[pl.BlockSpec((W, tm, C), lambda i, r: (0, i, r),
                                   **in_spec_kwargs)],
            out_specs=pl.BlockSpec((None, tm, C), lambda i, r: (r, i, 0)),
        ),
        compiler_params=pltpu.CompilerParams(
            dimension_semantics=("parallel", "parallel"),
            vmem_limit_bytes=vmem_limit,
        ),
        cost_estimate=cost,
    )(x_stacked)


# --------------------------------------------------------------------------- #
# Demo / correctness check
# --------------------------------------------------------------------------- #
def _reference(x):
    # x: [W_rank, B, S, D] -> [W, B, S, C]; reduce_scatter_tensor('sum', dim=-1)
    W = x.shape[0]
    chunks = jnp.stack(jnp.split(x.astype(jnp.float32), W, axis=-1), axis=0)
    return chunks.sum(axis=1)  # [W, B, S, C] in f32


if __name__ == "__main__":
    key = jax.random.PRNGKey(0)
    k1, k2 = jax.random.split(key)

    # --- case 1: f32, lane-dense chunks -> strided per-rank layout ---
    W, B, S, D = 2, 2, 8, 256          # C = 128
    x = jax.random.normal(k1, (W, B, S, D), dtype=jnp.float32)
    out = jax.block_until_ready(
        reduce_scatter_sum_lastdim(x.reshape(W, B * S, D))
    ).reshape(W, B, S, D // W)
    ref = _reference(x)
    assert out.shape == (W, B, S, D // W)
    assert jnp.allclose(out, ref, atol=1e-5, rtol=1e-5)

    # --- case 2: bf16, short chunk runs -> contiguous full-row layout ---
    W2, B2, S2, D2 = 4, 2, 8, 512      # C = 128, run = 256 B -> full-row path
    x2 = jax.random.normal(k2, (W2, B2, S2, D2), dtype=jnp.float32).astype(jnp.bfloat16)
    out2 = jax.block_until_ready(
        reduce_scatter_sum_lastdim(x2.reshape(W2, B2 * S2, D2))
    ).reshape(W2, B2, S2, D2 // W2)
    ref2 = _reference(x2).astype(jnp.bfloat16)
    assert out2.shape == (W2, B2, S2, D2 // W2)
    assert jnp.allclose(out2.astype(jnp.float32), ref2.astype(jnp.float32),
                        atol=2e-2, rtol=2e-2)

    print("KERNEL_OK")
</pallas_src>

<mosaic_0001>
module attributes {stable_mosaic.version = 11 : i64} {
  func.func @_rs_per_rank_kernel(%arg0: i32, %arg1: i32, %arg2: memref<2x16x128xf32, #tpu.memory_space<vmem>>, %arg3: memref<1x16x128xf32, #tpu.memory_space<vmem>>) attributes {dimension_semantics = [#tpu.dimension_semantics<parallel>, #tpu.dimension_semantics<parallel>], iteration_bounds = array<i64: 1, 2>, scalar_prefetch = 0 : i64, scratch_operands = 0 : i64, tpu.core_type = #tpu.core_type<tc>, window_params = [{transform_indices = @transform_0, window_bounds = array<i64: 2, 16, 128>}, {transform_indices = @transform_1, window_bounds = array<i64: 1, 16, 128>}]} {
    %c0 = arith.constant 0 : index
    %c0_0 = arith.constant 0 : index
    %c0_1 = arith.constant 0 : index
    %0 = vector.load %arg2[%c0, %c0_0, %c0_1] : memref<2x16x128xf32, #tpu.memory_space<vmem>>, vector<1x16x128xf32>
    %1 = vector.shape_cast %0 : vector<1x16x128xf32> to vector<16x128xf32>
    %c1 = arith.constant 1 : index
    %c0_2 = arith.constant 0 : index
    %c0_3 = arith.constant 0 : index
    %2 = vector.load %arg2[%c1, %c0_2, %c0_3] : memref<2x16x128xf32, #tpu.memory_space<vmem>>, vector<1x16x128xf32>
    %3 = vector.shape_cast %2 : vector<1x16x128xf32> to vector<16x128xf32>
    %4 = arith.addf %1, %3 : vector<16x128xf32>
    %c0_4 = arith.constant 0 : index
    %c0_5 = arith.constant 0 : index
    %c0_6 = arith.constant 0 : index
    %5 = vector.load %arg3[%c0_4, %c0_5, %c0_6] : memref<1x16x128xf32, #tpu.memory_space<vmem>>, vector<1x16x128xf32>
    %6 = vector.shape_cast %5 : vector<1x16x128xf32> to vector<16x128xf32>
    %7 = vector.shape_cast %4 : vector<16x128xf32> to vector<1x16x128xf32>
    tpu.vector_store %arg3[%c0_4, %c0_5, %c0_6], %7 {strides = array<i32>} : memref<1x16x128xf32, #tpu.memory_space<vmem>>, vector<1x16x128xf32>,
    return
  }
  func.func @transform_0(%arg0: i32, %arg1: i32) -> (i32, i32, i32) {
    %c0_i32 = arith.constant 0 : i32
    %c0_i32_0 = arith.constant 0 : i32
    return %c0_i32, %arg0, %arg1 : i32, i32, i32
  }
  func.func @transform_1(%arg0: i32, %arg1: i32) -> (i32, i32, i32) {
    %c0_i32 = arith.constant 0 : i32
    %c0_i32_0 = arith.constant 0 : i32
    return %arg1, %arg0, %c0_i32 : i32, i32, i32
  }
}

</mosaic_0001>

<llo_original>
// kernel: tpu_custom_call.1
$region0: #{tpu_custom_call.1}
  #allocation0 [shape = 'u32[]', space=smem, size = 0x4, offset = 0x4, fixed_abs, tag = 'smem constant byte address 0x4 - core index']
  #allocation1 [shape = 'u32[144,128]{1,0:T(1,128)}', space=vmem, size = 0x12000, scoped, tag = 'internal scratch']
  %s0 = inlined_call_operand.hbm [shape: f32[2,16,256], index: 0, kind: input, shape index: {}]
  %s1 = inlined_call_operand.hbm [shape: f32[2,16,128], index: 1, kind: output, shape index: {}]
  %s2 = sld [smem:[#allocation0]]
  $region41: #{tpu_custom_call.1} parent=0
    _
  %s4 = ssub.s32 1, %s2
  %s5 = scalar_select 0, %s4, %s2
  $region1: #{tpu_custom_call.1} parent=0
    #allocation2 [shape = 'u8[32768]{0}', space=vmem, size = 0x8000, scoped, tag = 'input window, operand 0']
    #allocation3 [shape = 's32[2]{0}', space=sflag, size = 0x8, scoped, tag = 'scoped memory for tpu_custom_call.1']
    #allocation4 [shape = 's32[2]{0}', space=sflag, size = 0x8, scoped, tag = 'scoped memory for tpu_custom_call.1']
    #allocation5 [shape = 'u8[16384]{0}', space=vmem, size = 0x4000, scoped, tag = 'output window, operand 0']
    %6 = vsyncpa [#allocation3], 0
    %s7 = scalar_lea.sflag [#allocation3], 1
    %8 = vsyncpa %s7, 0
    %9 = vsyncpa [#allocation4], 0
    %s10 = scalar_lea.sflag [#allocation4], 1
    %11 = vsyncpa %s10, 0
    loop: start=0, step=1, limit=4
    $region2: #{tpu_custom_call.1} parent=1 // loop_pre_header
      _
    $region3: #{tpu_custom_call.1} parent=1 // loop_header
      %s13 = sphi 0, %s17
      %p14 = scmp.ge.s32.totalorder %s13, 4
      %s20 = sphi 0, %s32
      %s21 = sphi 0, %s28
      %s22 = sphi 0, %s20
      %s23 = sphi 0, %s21
      %s24 = sphi 0, %s22
      %s25 = sphi 0, %s23
      %s37 = sphi 0, %s39
      %s40 = sphi 0, %s37
      %s41 = sphi 0, %s40
      %s57 = sphi 0, %s41
      %s65 = sphi 0, %s67
      %s68 = sphi 0, %s65
      %s69 = sphi 0, %s68
      %s85 = sphi 0, %s69
    $region4: #{tpu_custom_call.1} parent=1 // loop_header_branch
      %16 = sbr.rel (%p14) target = $region8
    $region5: #{tpu_custom_call.1} parent=1 // loop_body
      %s18 = ssub.s32 %s13, 1
      %s19 = ssub.s32 %s13, 2
      %s26 = sadd.s32 1, %s21
      %p27 = scmp.ge.s32.totalorder %s26, 2
      %s28 = scalar_select %p27, 0, %s26
      %s29 = sadd.s32 1, %s20
      %s30 = scalar_select %p27, %s29, %s20
      %p31 = scmp.ge.s32.totalorder %s30, 1
      %s32 = scalar_select %p31, 0, %s30
      %s33 = ssub.s32 %s20, %s32
      %s34 = ssub.s32 %s21, %s28
      %s35 = sor.u32 %s33, %s34
      %p36 = scmp.eq.s32.totalorder %s35, 0
      %s38 = sadd.s32 %s37, 1
      %s39 = scalar_select %p36, %s37, %s38
      %p42 = pneg %p36
      %p43 = scmp.eq.s32.totalorder %s13, 1
      %p44 = por %p42, %p43
      %p45 = scmp.ne.s32.totalorder %s37, %s40
      %p46 = scmp.eq.s32.totalorder %s13, 0
      %p47 = por %p45, %p46
      %p48 = scmp.ne.s32.totalorder %s37, %s40
      %p49 = scmp.eq.s32.totalorder %s18, 1
      %p50 = por %p48, %p49
      %p51 = scmp.ne.s32.totalorder %s40, %s41
      %p52 = scmp.eq.s32.totalorder %s18, 0
      %p53 = por %p51, %p52
      %p54 = scmp.ne.s32.totalorder %s40, %s41
      %p55 = scmp.eq.s32.totalorder %s19, 1
      %p56 = por %p54, %p55
      %p58 = scmp.ne.s32.totalorder %s41, %s57
      %p59 = scmp.eq.s32.totalorder %s19, 0
      %p60 = por %p58, %p59
      %s61 = ssub.s32 %s21, %s28
      %s62 = ssub.s32 %s20, %s32
      %s63 = sor.u32 %s61, %s62
      %p64 = scmp.eq.s32.totalorder %s63, 0
      %s66 = sadd.s32 %s65, 1
      %s67 = scalar_select %p64, %s65, %s66
      %p70 = pneg %p64
      %p71 = scmp.eq.s32.totalorder %s13, 1
      %p72 = por %p70, %p71
      %p73 = scmp.ne.s32.totalorder %s65, %s68
      %p74 = scmp.eq.s32.totalorder %s13, 0
      %p75 = por %p73, %p74
      %p76 = scmp.ne.s32.totalorder %s65, %s68
      %p77 = scmp.eq.s32.totalorder %s18, 1
      %p78 = por %p76, %p77
      %p79 = scmp.ne.s32.totalorder %s68, %s69
      %p80 = scmp.eq.s32.totalorder %s18, 0
      %p81 = por %p79, %p80
      %p82 = scmp.ne.s32.totalorder %s68, %s69
      %p83 = scmp.eq.s32.totalorder %s19, 1
      %p84 = por %p82, %p83
      %p86 = scmp.ne.s32.totalorder %s69, %s85
      %p87 = scmp.eq.s32.totalorder %s19, 0
      %p88 = por %p86, %p87
      %p89 = scmp.le.s32.totalorder 1, %s13
      %p90 = scmp.lt.s32.totalorder %s13, 3
      %p91 = pnand %p89, %p90
      %p92 = pneg %p91
      // Predicated region
      $region9: #{tpu_custom_call.1} parent=5 // pred_check
        _
      $region10: #{tpu_custom_call.1} parent=5 // pred_check_branch
        %94 = sbr.rel (%p91) target = $region12
      $region11: #{tpu_custom_call.1} parent=5 // pred_region
        %s95 = ssub.s32 %s13, 1
      $region12: #{tpu_custom_call.1} parent=5 // pred_fallthru
        _
      %p96 = scmp.lt.s32.totalorder %s13, 2
      // Predicated region
      $region13: #{tpu_custom_call.1} parent=5 // pred_check
        %p97 = pneg %p96
      $region14: #{tpu_custom_call.1} parent=5 // pred_check_branch
        %99 = sbr.rel (%p97) target = $region16
      $region15: #{tpu_custom_call.1} parent=5 // pred_region
        // Predicated region
        $region17: #{tpu_custom_call.1} parent=15 // pred_check
          %p100 = pneg %p47
        $region18: #{tpu_custom_call.1} parent=15 // pred_check_branch
          %102 = sbr.rel (%p100) target = $region20
        $region19: #{tpu_custom_call.1} parent=15 // pred_region
          %s103 = sand.u32 %s37, 1
          %s104 = scalar_lea.sflag [#allocation3], %s103
          %s105 = sand.u32 %s37, 1
          %s106 = smul.addr %s105, 32
          %s107 = scalar_lea.vmem [#allocation2], %s106
          %s108 = smul.u32 2, %s20
          %s110 = ssub.s32 512, 512
          %111 = vsyncadd %s104, %s110
          %s112 = smul.addr %s108, 2
          %s113 = sadd.s32 %s21, %s112
          %s114 = smul.addr %s113, 128
          %s115 = scalar_lea.hbm %s0, %s114
          %s116 = sshll.u32 %s107, 4
          %s117 = int_to_ptr.vmem [resolvable:$true] %s116
          %122 = dma.hbm_to_vmem [thread:$0]  %s115, 512, %s117, %s104, 256, 128, 8
        $region20: #{tpu_custom_call.1} parent=15 // pred_fallthru
          _
      $region16: #{tpu_custom_call.1} parent=5 // pred_fallthru
        _
      %p123 = scmp.le.s32.totalorder 1, %s13
      %p124 = scmp.lt.s32.totalorder %s13, 3
      %p125 = pnand %p123, %p124
      %p126 = pneg %p125
      // Predicated region
      $region21: #{tpu_custom_call.1} parent=5 // pred_check
        _
      $region22: #{tpu_custom_call.1} parent=5 // pred_check_branch
        %128 = sbr.rel (%p125) target = $region24
      $region23: #{tpu_custom_call.1} parent=5 // pred_region
        %s129 = ssub.s32 %s13, 1
        %s130 = sand.u32 %s40, 1
        %s131 = scalar_lea.sflag [#allocation3], %s130
        %s132 = sand.u32 %s40, 1
        %s133 = smul.addr %s132, 32
        %s134 = scalar_lea.vmem [#allocation2], %s133
        // Predicated region
        $region25: #{tpu_custom_call.1} parent=23 // pred_check
          %p135 = pneg %p53
        $region26: #{tpu_custom_call.1} parent=23 // pred_check_branch
          %137 = sbr.rel (%p135) target = $region28
        $region27: #{tpu_custom_call.1} parent=23 // pred_region
          %138 = dma.done %s131, 512
        $region28: #{tpu_custom_call.1} parent=23 // pred_fallthru
          _
        %s139 = sand.u32 %s40, 1
        %s140 = scalar_lea.sflag [#allocation3], %s139
        %s141 = sand.u32 %s40, 1
        %s142 = smul.addr %s141, 32
        %s143 = scalar_lea.vmem [#allocation2], %s142
        %p144 = pneg %p53
        %p145 = pneg %p50
        %p146 = pneg %p81
        %p147 = pneg %p78
        %s148 = sand.u32 %s68, 1
        %s149 = scalar_lea.sflag [#allocation4], %s148
        %s150 = sand.u32 %s68, 1
        %s151 = smul.addr %s150, 16
        %s152 = scalar_lea.vmem [#allocation5], %s151
        %s153 = smul.u32 2, %s22
        %s154 = smul.u32 2, %s22
        %v155 = vld [vmem:[%s134] sm:$0xff]
        %v156 = vld [vmem:[%s134 + $0x8] sm:$0xff]
        %s157 = scalar_lea.vmem %s134, 16 [#allocation2]
        %v158 = vld [vmem:[%s157] sm:$0xff]
        %v159 = vld [vmem:[%s157 + $0x8] sm:$0xff]
        %v160 = vadd.f32 %v155, %v158
        %v161 = vadd.f32 %v156, %v159
        %162 = vst [vmem:[%s152] sm:$0xff] %v160
        %163 = vst [vmem:[%s152 + $0x8] sm:$0xff] %v161
        %s164 = sand.u32 %s68, 1
        %s165 = scalar_lea.sflag [#allocation4], %s164
        %s166 = sand.u32 %s68, 1
        %s167 = smul.addr %s166, 16
        %s168 = scalar_lea.vmem [#allocation5], %s167
        // Predicated region
        $region29: #{tpu_custom_call.1} parent=23 // pred_check
          %p169 = pneg %p78
        $region30: #{tpu_custom_call.1} parent=23 // pred_check_branch
          %171 = sbr.rel (%p169) target = $region32
        $region31: #{tpu_custom_call.1} parent=23 // pred_region
          %s172 = smul.u32 2, %s22
          %s174 = ssub.s32 256, 256
          %175 = vsyncadd %s165, %s174
          %s176 = smul.addr %s23, 2
          %s177 = sadd.s32 %s172, %s176
          %s178 = smul.addr %s177, 128
          %s179 = scalar_lea.hbm %s1, %s178
          %s180 = sshll.u32 %s168, 4
          %s181 = int_to_ptr.vmem [resolvable:$true] %s180
          %186 = dma.vmem_to_hbm [thread:$0]  %s181, 256, %s179, %s165, 128, 128, 8
        $region32: #{tpu_custom_call.1} parent=23 // pred_fallthru
          _
      $region24: #{tpu_custom_call.1} parent=5 // pred_fallthru
        _
      %p187 = scmp.le.s32.totalorder 2, %s13
      // Predicated region
      $region33: #{tpu_custom_call.1} parent=5 // pred_check
        %p188 = pneg %p187
      $region34: #{tpu_custom_call.1} parent=5 // pred_check_branch
        %190 = sbr.rel (%p188) target = $region36
      $region35: #{tpu_custom_call.1} parent=5 // pred_region
        %s191 = ssub.s32 %s13, 2
        // Predicated region
        $region37: #{tpu_custom_call.1} parent=35 // pred_check
          %p192 = pneg %p84
        $region38: #{tpu_custom_call.1} parent=35 // pred_check_branch
          %194 = sbr.rel (%p192) target = $region40
        $region39: #{tpu_custom_call.1} parent=35 // pred_region
          %s195 = sand.u32 %s69, 1
          %s196 = scalar_lea.sflag [#allocation4], %s195
          %s197 = sand.u32 %s69, 1
          %s198 = smul.addr %s197, 16
          %s199 = scalar_lea.vmem [#allocation5], %s198
          %200 = dma.done %s196, 256
        $region40: #{tpu_custom_call.1} parent=35 // pred_fallthru
          _
      $region36: #{tpu_custom_call.1} parent=5 // pred_fallthru
        _
    $region6: #{tpu_custom_call.1} parent=1 // loop_footer
      %s17 = sadd.s32 1, %s13
    $region7: #{tpu_custom_call.1} parent=1 // loop_footer_branch
      %12 = sbr.rel target = $region3
    $region8: #{tpu_custom_call.1} parent=1 // loop_exit
      _
    %201 = vsyncpa [#allocation3], 1
    %s202 = scalar_lea.sflag [#allocation3], 1
    %203 = vsyncpa %s202, 1
    %204 = vsyncpa [#allocation4], 1
    %s205 = scalar_lea.sflag [#allocation4], 1
    %206 = vsyncpa %s205, 1

</llo_original>
